<compile_context>
chip_gen: v7x
topology: tpu7x:2x2x1
jax: 0.10.0
libtpu: 0.0.40
codegen_flags: <defaults>
</compile_context>

<pallas_src>
import functools

import jax
import jax.numpy as jnp
from jax.experimental import pallas as pl
from jax.experimental.pallas import tpu as pltpu


def _round_up(x, m):
    return ((x + m - 1) // m) * m


def _cdiv(a, b):
    return -(-a // b)


# --------------------------------- kernel ------------------------------------

def _channel_norm_kernel(x_ref, w_ref, b_ref, o_ref, *, epsilon, num_features):
    # x_ref: (Bb, C, TL)   w_ref/b_ref: (1, C, 1)   o_ref: (Bb, C, TL)
    x = x_ref[...].astype(jnp.float32)
    mean = jnp.mean(x, axis=1, keepdims=True)                  # (Bb, 1, TL) cross-sublane reduce
    centered = x - mean
    denom = float(max(num_features - 1, 1))                    # torch.var default: unbiased
    var = jnp.sum(centered * centered, axis=1, keepdims=True) * (1.0 / denom)
    inv = jax.lax.rsqrt(var + epsilon)                         # EUP rsqrt
    y = centered * inv * w_ref[...].astype(jnp.float32) + b_ref[...].astype(jnp.float32)
    o_ref[...] = y.astype(o_ref.dtype)


# ----------------------------- tile selection ---------------------------------

def _choose_tiles(b, c, l, dtype_bytes):
    """Pick (Bb, TL) so that double-buffered in+out blocks fit a conservative
    VMEM budget (safe on v5e/v6e/v7x) while amortizing per-grid-step overhead."""
    budget = 8 * 1024 * 1024                       # per-block-set VMEM budget
    bytes_per_col = max(1, c * dtype_bytes)
    # 4 resident copies of the block: {input, output} x double-buffering.
    max_cols = max(128, (budget // (4 * bytes_per_col) // 128) * 128)
    max_tl = min(8192, max_cols)

    if l <= max_tl:
        tl = l                                     # single full-dim time tile (always legal)
        lanes = _round_up(max(l, 1), 128)
        bb = max(1, min(b, max_cols // lanes))
        # Keep >= 2 grid steps when possible (v7x has 2 TensorCores).
        while bb > 1 and _cdiv(b, bb) < 2:
            bb -= 1
    else:
        tl = max_tl                                # multiple of 128; ragged last block is fine
        bb = 1
    return bb, tl


# -------------------------------- wrapper ------------------------------------

@functools.partial(jax.jit, static_argnames=("epsilon",))
def channel_norm_forward(x, weight=None, bias=None, epsilon=1e-5):
    """x: (B, C, L); weight/bias broadcastable to (1, C, 1) or None. Returns (B, C, L) in x.dtype."""
    b, c, l = x.shape

    if weight is None:
        weight = jnp.ones((c,), dtype=jnp.float32)
    if bias is None:
        bias = jnp.zeros((c,), dtype=jnp.float32)
    w3 = jnp.reshape(weight, (1, c, 1)).astype(jnp.float32)
    b3 = jnp.reshape(bias, (1, c, 1)).astype(jnp.float32)

    dtype_bytes = jnp.dtype(x.dtype).itemsize
    bb, tl = _choose_tiles(b, c, l, dtype_bytes)
    grid = (_cdiv(b, bb), _cdiv(l, tl))

    cost = pl.CostEstimate(
        flops=5 * b * c * l,
        transcendentals=b * l,
        bytes_accessed=2 * b * c * l * dtype_bytes + 2 * c * 4,
    )

    out = pl.pallas_call(
        functools.partial(_channel_norm_kernel, epsilon=float(epsilon), num_features=c),
        out_shape=jax.ShapeDtypeStruct((b, c, l), x.dtype),
        grid_spec=pltpu.PrefetchScalarGridSpec(
            num_scalar_prefetch=0,
            grid=grid,
            in_specs=[
                pl.BlockSpec((bb, c, tl), lambda i, j: (i, 0, j)),
                pl.BlockSpec((1, c, 1), lambda i, j: (0, 0, 0)),
                pl.BlockSpec((1, c, 1), lambda i, j: (0, 0, 0)),
            ],
            out_specs=pl.BlockSpec((bb, c, tl), lambda i, j: (i, 0, j)),
        ),
        compiler_params=pltpu.CompilerParams(
            dimension_semantics=("parallel", "parallel")),
        cost_estimate=cost,
    )(x, w3, b3)

    return out


# ---------------------------- pure-JAX reference ------------------------------

def _channel_norm_ref(x, weight, bias, epsilon=1e-5):
    x = x.astype(jnp.float32)
    c = x.shape[1]
    mean = jnp.mean(x, axis=1, keepdims=True)
    var = jnp.sum((x - mean) ** 2, axis=1, keepdims=True) / max(c - 1, 1)   # unbiased
    y = (x - mean) * jax.lax.rsqrt(var + epsilon)
    return y * weight.reshape(1, c, 1) + bias.reshape(1, c, 1)


# ----------------------------------- main -------------------------------------

if __name__ == "__main__":
    batch = 2
    num_features = 32
    seq_len = 300          # deliberately NOT a multiple of 128 (exercises ragged/full-dim tile)

    key = jax.random.PRNGKey(0)
    kx, kw, kb = jax.random.split(key, 3)
    x = jax.random.normal(kx, (batch, num_features, seq_len), dtype=jnp.float32)
    # reset_parameters() gives ones/zeros; use random affine params to exercise the path.
    weight = 1.0 + 0.1 * jax.random.normal(kw, (num_features,), dtype=jnp.float32)
    bias = 0.1 * jax.random.normal(kb, (num_features,), dtype=jnp.float32)

    y = channel_norm_forward(x, weight, bias, epsilon=1e-5)
    y = jax.block_until_ready(y)

    assert y.shape == (batch, num_features, seq_len), y.shape
    assert jnp.all(jnp.isfinite(y))

    y_ref = _channel_norm_ref(x, weight, bias, epsilon=1e-5)
    assert jnp.allclose(y, y_ref, atol=1e-5, rtol=1e-5), float(jnp.max(jnp.abs(y - y_ref)))

    # Second case: bf16 I/O (half the HBM bytes) with affine=False semantics.
    x2 = jax.random.normal(kx, (1, 16, 1000), dtype=jnp.bfloat16)
    y2 = jax.block_until_ready(channel_norm_forward(x2, None, None, epsilon=1e-5))
    assert y2.dtype == jnp.bfloat16 and y2.shape == (1, 16, 1000)
    y2_ref = _channel_norm_ref(x2, jnp.ones((16,), jnp.float32), jnp.zeros((16,), jnp.float32))
    assert jnp.allclose(y2.astype(jnp.float32), y2_ref, atol=5e-2, rtol=5e-2)

    print("KERNEL_OK")
</pallas_src>

<mosaic_0001>
module attributes {stable_mosaic.version = 11 : i64} {
  func.func @_channel_norm_kernel(%arg0: i32, %arg1: i32, %arg2: memref<1x32x300xf32, #tpu.memory_space<vmem>>, %arg3: memref<1x32x1xf32, #tpu.memory_space<vmem>>, %arg4: memref<1x32x1xf32, #tpu.memory_space<vmem>>, %arg5: memref<1x32x300xf32, #tpu.memory_space<vmem>>) attributes {dimension_semantics = [#tpu.dimension_semantics<parallel>, #tpu.dimension_semantics<parallel>], iteration_bounds = array<i64: 2, 1>, scalar_prefetch = 0 : i64, scratch_operands = 0 : i64, tpu.core_type = #tpu.core_type<tc>, window_params = [{transform_indices = @transform_0, window_bounds = array<i64: 1, 32, 300>}, {pipeline_mode = #tpu.pipeline_mode<synchronous>, transform_indices = @transform_1, window_bounds = array<i64: 1, 32, 1>}, {pipeline_mode = #tpu.pipeline_mode<synchronous>, transform_indices = @transform_2, window_bounds = array<i64: 1, 32, 1>}, {transform_indices = @transform_3, window_bounds = array<i64: 1, 32, 300>}]} {
    %c0 = arith.constant 0 : index
    %c0_0 = arith.constant 0 : index
    %c0_1 = arith.constant 0 : index
    %0 = vector.load %arg2[%c0, %c0_0, %c0_1] : memref<1x32x300xf32, #tpu.memory_space<vmem>>, vector<1x32x300xf32>
    %cst = arith.constant dense<0.000000e+00> : vector<1x300xf32>
    %1 = vector.multi_reduction <add>, %0, %cst [1] : vector<1x32x300xf32> to vector<1x300xf32>
    %2 = vector.shape_cast %1 : vector<1x300xf32> to vector<1x1x300xf32>
    %cst_2 = arith.constant 3.200000e+01 : f32
    %3 = vector.broadcast %cst_2 : f32 to vector<1x1x300xf32>
    %4 = arith.divf %2, %3 : vector<1x1x300xf32>
    %5 = vector.broadcast %4 : vector<1x1x300xf32> to vector<1x32x300xf32>
    %6 = arith.subf %0, %5 : vector<1x32x300xf32>
    %7 = arith.mulf %6, %6 : vector<1x32x300xf32>
    %cst_3 = arith.constant dense<0.000000e+00> : vector<1x300xf32>
    %8 = vector.multi_reduction <add>, %7, %cst_3 [1] : vector<1x32x300xf32> to vector<1x300xf32>
    %9 = vector.shape_cast %8 : vector<1x300xf32> to vector<1x1x300xf32>
    %cst_4 = arith.constant 0.0322580636 : f32
    %10 = vector.broadcast %cst_4 : f32 to vector<1x1x300xf32>
    %11 = arith.mulf %9, %10 : vector<1x1x300xf32>
    %cst_5 = arith.constant 9.99999974E-6 : f32
    %12 = vector.broadcast %cst_5 : f32 to vector<1x1x300xf32>
    %13 = arith.addf %11, %12 : vector<1x1x300xf32>
    %14 = math.rsqrt %13 : vector<1x1x300xf32>
    %15 = vector.broadcast %14 : vector<1x1x300xf32> to vector<1x32x300xf32>
    %16 = arith.mulf %6, %15 : vector<1x32x300xf32>
    %c0_6 = arith.constant 0 : index
    %c0_7 = arith.constant 0 : index
    %c0_8 = arith.constant 0 : index
    %17 = vector.load %arg3[%c0_6, %c0_7, %c0_8] : memref<1x32x1xf32, #tpu.memory_space<vmem>>, vector<1x32x1xf32>
    %18 = vector.broadcast %17 : vector<1x32x1xf32> to vector<1x32x300xf32>
    %19 = arith.mulf %16, %18 : vector<1x32x300xf32>
    %c0_9 = arith.constant 0 : index
    %c0_10 = arith.constant 0 : index
    %c0_11 = arith.constant 0 : index
    %20 = vector.load %arg4[%c0_9, %c0_10, %c0_11] : memref<1x32x1xf32, #tpu.memory_space<vmem>>, vector<1x32x1xf32>
    %21 = vector.broadcast %20 : vector<1x32x1xf32> to vector<1x32x300xf32>
    %22 = arith.addf %19, %21 : vector<1x32x300xf32>
    %c0_12 = arith.constant 0 : index
    %c0_13 = arith.constant 0 : index
    %c0_14 = arith.constant 0 : index
    %23 = vector.load %arg5[%c0_12, %c0_13, %c0_14] : memref<1x32x300xf32, #tpu.memory_space<vmem>>, vector<1x32x300xf32>
    tpu.vector_store %arg5[%c0_12, %c0_13, %c0_14], %22 {strides = array<i32>} : memref<1x32x300xf32, #tpu.memory_space<vmem>>, vector<1x32x300xf32>,
    return
  }
  func.func @transform_0(%arg0: i32, %arg1: i32) -> (i32, i32, i32) {
    %c0_i32 = arith.constant 0 : i32
    %c0_i32_0 = arith.constant 0 : i32
    return %arg0, %c0_i32, %arg1 : i32, i32, i32
  }
  func.func @transform_1(%arg0: i32, %arg1: i32) -> (i32, i32, i32) {
    %c0_i32 = arith.constant 0 : i32
    %c0_i32_0 = arith.constant 0 : i32
    %c0_i32_1 = arith.constant 0 : i32
    %c0_i32_2 = arith.constant 0 : i32
    return %c0_i32, %c0_i32_0, %c0_i32_1 : i32, i32, i32
  }
  func.func @transform_2(%arg0: i32, %arg1: i32) -> (i32, i32, i32) {
    %c0_i32 = arith.constant 0 : i32
    %c0_i32_0 = arith.constant 0 : i32
    %c0_i32_1 = arith.constant 0 : i32
    %c0_i32_2 = arith.constant 0 : i32
    return %c0_i32, %c0_i32_0, %c0_i32_1 : i32, i32, i32
  }
  func.func @transform_3(%arg0: i32, %arg1: i32) -> (i32, i32, i32) {
    %c0_i32 = arith.constant 0 : i32
    %c0_i32_0 = arith.constant 0 : i32
    return %arg0, %c0_i32, %arg1 : i32, i32, i32
  }
}

</mosaic_0001>

<llo_original>
// kernel: channel_norm_forward.1
$region0: #{channel_norm_forward.1}
  #allocation0 [shape = 'u32[]', space=smem, size = 0x4, offset = 0x4, fixed_abs, tag = 'smem constant byte address 0x4 - core index']
  #allocation1 [shape = 'u32[144,128]{1,0:T(1,128)}', space=vmem, size = 0x12000, scoped, tag = 'internal scratch']
  %s0 = inlined_call_operand.hbm [shape: f32[2,32,300], index: 0, kind: input, shape index: {}]
  %s1 = inlined_call_operand.vmem [shape: f32[1,32,1], index: 1, kind: input, shape index: {}]
  %s2 = inlined_call_operand.vmem [shape: f32[1,32,1], index: 2, kind: input, shape index: {}]
  %s3 = inlined_call_operand.hbm [shape: f32[2,32,300], index: 3, kind: output, shape index: {}]
  %s4 = sld [smem:[#allocation0]]
  $region49: #{channel_norm_forward.1} parent=0
    _
  %s6 = ssub.s32 1, %s4
  %s7 = scalar_select 0, %s6, %s4
  $region1: #{channel_norm_forward.1} parent=0
    #allocation2 [shape = 'u8[98304]{0}', space=vmem, size = 0x18000, scoped, tag = 'input window, operand 0']
    #allocation3 [shape = 's32[2]{0}', space=sflag, size = 0x8, scoped, tag = 'scoped memory for channel_norm_forward.1']
    #allocation4 [shape = 's32[2]{0}', space=sflag, size = 0x8, scoped, tag = 'scoped memory for channel_norm_forward.1']
    #allocation5 [shape = 'u8[98304]{0}', space=vmem, size = 0x18000, scoped, tag = 'output window, operand 0']
    %8 = vsyncpa [#allocation3], 0
    %s9 = scalar_lea.sflag [#allocation3], 1
    %10 = vsyncpa %s9, 0
    %11 = vsyncpa [#allocation4], 0
    %s12 = scalar_lea.sflag [#allocation4], 1
    %13 = vsyncpa %s12, 0
    loop: start=0, step=1, limit=4
    $region2: #{channel_norm_forward.1} parent=1 // loop_pre_header
      _
    $region3: #{channel_norm_forward.1} parent=1 // loop_header
      %s15 = sphi 0, %s19
      %p16 = scmp.ge.s32.totalorder %s15, 4
      %s22 = sphi 0, %s34
      %s23 = sphi 0, %s30
      %s24 = sphi 0, %s22
      %s25 = sphi 0, %s23
      %s26 = sphi 0, %s24
      %s27 = sphi 0, %s25
      %s39 = sphi 0, %s41
      %s42 = sphi 0, %s39
      %s43 = sphi 0, %s42
      %s59 = sphi 0, %s43
      %s63 = sphi 0, %s63
      %s65 = sphi 0, %s63
      %s66 = sphi 0, %s65
      %s80 = sphi 0, %s66
      %s84 = sphi 0, %s84
      %s86 = sphi 0, %s84
      %s87 = sphi 0, %s86
      %s101 = sphi 0, %s87
      %s109 = sphi 0, %s111
      %s112 = sphi 0, %s109
      %s113 = sphi 0, %s112
      %s129 = sphi 0, %s113
    $region4: #{channel_norm_forward.1} parent=1 // loop_header_branch
      %18 = sbr.rel (%p16) target = $region8
    $region5: #{channel_norm_forward.1} parent=1 // loop_body
      %s20 = ssub.s32 %s15, 1
      %s21 = ssub.s32 %s15, 2
      %s28 = sadd.s32 1, %s23
      %p29 = scmp.ge.s32.totalorder %s28, 1
      %s30 = scalar_select %p29, 0, %s28
      %s31 = sadd.s32 1, %s22
      %s32 = scalar_select %p29, %s31, %s22
      %p33 = scmp.ge.s32.totalorder %s32, 2
      %s34 = scalar_select %p33, 0, %s32
      %s35 = ssub.s32 %s22, %s34
      %s36 = ssub.s32 %s23, %s30
      %s37 = sor.u32 %s35, %s36
      %p38 = scmp.eq.s32.totalorder %s37, 0
      %s40 = sadd.s32 %s39, 1
      %s41 = scalar_select %p38, %s39, %s40
      %p44 = pneg %p38
      %p45 = scmp.eq.s32.totalorder %s15, 1
      %p46 = por %p44, %p45
      %p47 = scmp.ne.s32.totalorder %s39, %s42
      %p48 = scmp.eq.s32.totalorder %s15, 0
      %p49 = por %p47, %p48
      %p50 = scmp.ne.s32.totalorder %s39, %s42
      %p51 = scmp.eq.s32.totalorder %s20, 1
      %p52 = por %p50, %p51
      %p53 = scmp.ne.s32.totalorder %s42, %s43
      %p54 = scmp.eq.s32.totalorder %s20, 0
      %p55 = por %p53, %p54
      %p56 = scmp.ne.s32.totalorder %s42, %s43
      %p57 = scmp.eq.s32.totalorder %s21, 1
      %p58 = por %p56, %p57
      %p60 = scmp.ne.s32.totalorder %s43, %s59
      %p61 = scmp.eq.s32.totalorder %s21, 0
      %p62 = por %p60, %p61
      %s64 = sadd.s32 %s63, 1
      %p67 = scmp.eq.s32.totalorder %s15, 1
      %p68 = scmp.ne.s32.totalorder %s63, %s65
      %p69 = scmp.eq.s32.totalorder %s15, 0
      %p70 = por %p68, %p69
      %p71 = scmp.ne.s32.totalorder %s63, %s65
      %p72 = scmp.eq.s32.totalorder %s20, 1
      %p73 = por %p71, %p72
      %p74 = scmp.ne.s32.totalorder %s65, %s66
      %p75 = scmp.eq.s32.totalorder %s20, 0
      %p76 = por %p74, %p75
      %p77 = scmp.ne.s32.totalorder %s65, %s66
      %p78 = scmp.eq.s32.totalorder %s21, 1
      %p79 = por %p77, %p78
      %p81 = scmp.ne.s32.totalorder %s66, %s80
      %p82 = scmp.eq.s32.totalorder %s21, 0
      %p83 = por %p81, %p82
      %s85 = sadd.s32 %s84, 1
      %p88 = scmp.eq.s32.totalorder %s15, 1
      %p89 = scmp.ne.s32.totalorder %s84, %s86
      %p90 = scmp.eq.s32.totalorder %s15, 0
      %p91 = por %p89, %p90
      %p92 = scmp.ne.s32.totalorder %s84, %s86
      %p93 = scmp.eq.s32.totalorder %s20, 1
      %p94 = por %p92, %p93
      %p95 = scmp.ne.s32.totalorder %s86, %s87
      %p96 = scmp.eq.s32.totalorder %s20, 0
      %p97 = por %p95, %p96
      %p98 = scmp.ne.s32.totalorder %s86, %s87
      %p99 = scmp.eq.s32.totalorder %s21, 1
      %p100 = por %p98, %p99
      %p102 = scmp.ne.s32.totalorder %s87, %s101
      %p103 = scmp.eq.s32.totalorder %s21, 0
      %p104 = por %p102, %p103
      %s105 = ssub.s32 %s22, %s34
      %s106 = ssub.s32 %s23, %s30
      %s107 = sor.u32 %s105, %s106
      %p108 = scmp.eq.s32.totalorder %s107, 0
      %s110 = sadd.s32 %s109, 1
      %s111 = scalar_select %p108, %s109, %s110
      %p114 = pneg %p108
      %p115 = scmp.eq.s32.totalorder %s15, 1
      %p116 = por %p114, %p115
      %p117 = scmp.ne.s32.totalorder %s109, %s112
      %p118 = scmp.eq.s32.totalorder %s15, 0
      %p119 = por %p117, %p118
      %p120 = scmp.ne.s32.totalorder %s109, %s112
      %p121 = scmp.eq.s32.totalorder %s20, 1
      %p122 = por %p120, %p121
      %p123 = scmp.ne.s32.totalorder %s112, %s113
      %p124 = scmp.eq.s32.totalorder %s20, 0
      %p125 = por %p123, %p124
      %p126 = scmp.ne.s32.totalorder %s112, %s113
      %p127 = scmp.eq.s32.totalorder %s21, 1
      %p128 = por %p126, %p127
      %p130 = scmp.ne.s32.totalorder %s113, %s129
      %p131 = scmp.eq.s32.totalorder %s21, 0
      %p132 = por %p130, %p131
      %p133 = scmp.le.s32.totalorder 1, %s15
      %p134 = scmp.lt.s32.totalorder %s15, 3
      %p135 = pnand %p133, %p134
      %p136 = pneg %p135
      // Predicated region
      $region9: #{channel_norm_forward.1} parent=5 // pred_check
        _
      $region10: #{channel_norm_forward.1} parent=5 // pred_check_branch
        %138 = sbr.rel (%p135) target = $region12
      $region11: #{channel_norm_forward.1} parent=5 // pred_region
        %s139 = ssub.s32 %s15, 1
        // Predicated region
        $region13: #{channel_norm_forward.1} parent=11 // pred_check
          %p140 = pneg %p76
        $region14: #{channel_norm_forward.1} parent=11 // pred_check_branch
          %142 = sbr.rel (%p140) target = $region16
        $region15: #{channel_norm_forward.1} parent=11 // pred_region
          _
        $region16: #{channel_norm_forward.1} parent=11 // pred_fallthru
          _
        // Predicated region
        $region17: #{channel_norm_forward.1} parent=11 // pred_check
          %p143 = pneg %p97
        $region18: #{channel_norm_forward.1} parent=11 // pred_check_branch
          %145 = sbr.rel (%p143) target = $region20
        $region19: #{channel_norm_forward.1} parent=11 // pred_region
          _
        $region20: #{channel_norm_forward.1} parent=11 // pred_fallthru
          _
      $region12: #{channel_norm_forward.1} parent=5 // pred_fallthru
        _
      %p146 = scmp.lt.s32.totalorder %s15, 2
      // Predicated region
      $region21: #{channel_norm_forward.1} parent=5 // pred_check
        %p147 = pneg %p146
      $region22: #{channel_norm_forward.1} parent=5 // pred_check_branch
        %149 = sbr.rel (%p147) target = $region24
      $region23: #{channel_norm_forward.1} parent=5 // pred_region
        // Predicated region
        $region25: #{channel_norm_forward.1} parent=23 // pred_check
          %p150 = pneg %p49
        $region26: #{channel_norm_forward.1} parent=23 // pred_check_branch
          %152 = sbr.rel (%p150) target = $region28
        $region27: #{channel_norm_forward.1} parent=23 // pred_region
          %s153 = sand.u32 %s39, 1
          %s154 = scalar_lea.sflag [#allocation3], %s153
          %s155 = sand.u32 %s39, 1
          %s156 = smul.addr %s155, 96
          %s157 = scalar_lea.vmem [#allocation2], %s156
          %s158 = smul.u32 3, %s23
          %s160 = ssub.s32 1536, 1536
          %161 = vsyncadd %s154, %s160
          %s162 = smul.addr %s22, 12
          %s163 = sadd.s32 %s158, %s162
          %s164 = smul.addr %s163, 128
          %s165 = scalar_lea.hbm %s0, %s164
          %s166 = sshll.u32 %s157, 4
          %s167 = int_to_ptr.vmem [resolvable:$true] %s166
          %172 = dma.hbm_to_vmem [thread:$0]  %s165, 1536, %s167, %s154, 384, 384, 24
        $region28: #{channel_norm_forward.1} parent=23 // pred_fallthru
          _
      $region24: #{channel_norm_forward.1} parent=5 // pred_fallthru
        _
      %p173 = scmp.le.s32.totalorder 1, %s15
      %p174 = scmp.lt.s32.totalorder %s15, 3
      %p175 = pnand %p173, %p174
      %p176 = pneg %p175
      // Predicated region
      $region29: #{channel_norm_forward.1} parent=5 // pred_check
        _
      $region30: #{channel_norm_forward.1} parent=5 // pred_check_branch
        %178 = sbr.rel (%p175) target = $region32
      $region31: #{channel_norm_forward.1} parent=5 // pred_region
        %s179 = ssub.s32 %s15, 1
        %s180 = sand.u32 %s42, 1
        %s181 = scalar_lea.sflag [#allocation3], %s180
        %s182 = sand.u32 %s42, 1
        %s183 = smul.addr %s182, 96
        %s184 = scalar_lea.vmem [#allocation2], %s183
        // Predicated region
        $region33: #{channel_norm_forward.1} parent=31 // pred_check
          %p185 = pneg %p55
        $region34: #{channel_norm_forward.1} parent=31 // pred_check_branch
          %187 = sbr.rel (%p185) target = $region36
        $region35: #{channel_norm_forward.1} parent=31 // pred_region
          %188 = dma.done %s181, 1536
        $region36: #{channel_norm_forward.1} parent=31 // pred_fallthru
          _
        %s189 = sand.u32 %s42, 1
        %s190 = scalar_lea.sflag [#allocation3], %s189
        %s191 = sand.u32 %s42, 1
        %s192 = smul.addr %s191, 96
        %s193 = scalar_lea.vmem [#allocation2], %s192
        %p194 = pneg %p55
        %p195 = pneg %p52
        %p196 = pneg %p76
        %p197 = pneg %p73
        %p198 = pneg %p97
        %p199 = pneg %p94
        %p200 = pneg %p125
        %p201 = pneg %p122
        %s202 = sand.u32 %s112, 1
        %s203 = scalar_lea.sflag [#allocation4], %s202
        %s204 = sand.u32 %s112, 1
        %s205 = smul.addr %s204, 96
        %s206 = scalar_lea.vmem [#allocation5], %s205
        %s207 = smul.u32 3, %s25
        %s208 = smul.u32 3, %s25
        %v209 = vld [vmem:[%s184] sm:$0xff]
        %v210 = vld [vmem:[%s184 + $0x8] sm:$0xff]
        %v211 = vld [vmem:[%s184 + $0x10] sm:$0xff]
        %v212 = vld [vmem:[%s184 + $0x18] sm:$0xff]
        %v213 = vld [vmem:[%s184 + $0x20] sm:$0xff]
        %v214 = vld [vmem:[%s184 + $0x28] sm:$0xff]
        %v215 = vld [vmem:[%s184 + $0x30] sm:$0xff]
        %v216 = vld [vmem:[%s184 + $0x38] sm:$0xff]
        %v217 = vld [vmem:[%s184 + $0x40] sm:$0xff]
        %v218 = vld [vmem:[%s184 + $0x48] sm:$0xff]
        %v219 = vld [vmem:[%s184 + $0x50] sm:$0xff]
        %v220 = vld [vmem:[%s184 + $0x58] sm:$0xff]
        %v221 = vadd.f32 %v209, %v212
        %v222 = vadd.f32 %v221, %v215
        %v223 = vadd.f32 %v222, %v218
        %v224 = vrot.slane %v223, 4
        %v225 = vadd.f32 %v223, %v224
        %v226 = vrot.slane %v225, 2
        %v227 = vadd.f32 %v225, %v226
        %v228 = vrot.slane %v227, 1
        %v229 = vadd.f32 %v227, %v228
        %v230 = vadd.f32 %v210, %v213
        %v231 = vadd.f32 %v230, %v216
        %v232 = vadd.f32 %v231, %v219
        %v233 = vrot.slane %v232, 4
        %v234 = vadd.f32 %v232, %v233
        %v235 = vrot.slane %v234, 2
        %v236 = vadd.f32 %v234, %v235
        %v237 = vrot.slane %v236, 1
        %v238 = vadd.f32 %v236, %v237
        %vm239 = vcmask 359424
        %v240 = vsel %vm239, %v211, 0.0
        %v241 = vsel %vm239, %v214, 0.0
        %v242 = vadd.f32 %v240, %v241
        %v243 = vsel %vm239, %v217, 0.0
        %v244 = vadd.f32 %v242, %v243
        %v245 = vsel %vm239, %v220, 0.0
        %v246 = vadd.f32 %v244, %v245
        %v247 = vrot.slane %v246, 4
        %v248 = vadd.f32 %v246, %v247
        %v249 = vrot.slane %v248, 2
        %v250 = vadd.f32 %v248, %v249
        %v251 = vrot.slane %v250, 1
        %v252 = vadd.f32 %v250, %v251
        %v253 = vrcp.pop 32.0
        %v254 = vmul.f32 %v229, %v253
        %v255 = vmul.f32 %v238, %v253
        %v256 = vmul.f32 %v252, %v253
        %v257 = vsub.f32 %v209, %v254
        %v258 = vsub.f32 %v210, %v255
        %v259 = vsub.f32 %v211, %v256
        %v260 = vsub.f32 %v212, %v254
        %v261 = vsub.f32 %v213, %v255
        %v262 = vsub.f32 %v214, %v256
        %v263 = vsub.f32 %v215, %v254
        %v264 = vsub.f32 %v216, %v255
        %v265 = vsub.f32 %v217, %v256
        %v266 = vsub.f32 %v218, %v254
        %v267 = vsub.f32 %v219, %v255
        %v268 = vsub.f32 %v220, %v256
        %v269 = vmul.f32 %v257, %v257
        %v270 = vmul.f32 %v258, %v258
        %v271 = vmul.f32 %v259, %v259
        %v272 = vmul.f32 %v260, %v260
        %v273 = vmul.f32 %v261, %v261
        %v274 = vmul.f32 %v262, %v262
        %v275 = vmul.f32 %v263, %v263
        %v276 = vmul.f32 %v264, %v264
        %v277 = vmul.f32 %v265, %v265
        %v278 = vmul.f32 %v266, %v266
        %v279 = vmul.f32 %v267, %v267
        %v280 = vmul.f32 %v268, %v268
        %v281 = vadd.f32 %v269, %v272
        %v282 = vadd.f32 %v281, %v275
        %v283 = vadd.f32 %v282, %v278
        %v284 = vrot.slane %v283, 4
        %v285 = vadd.f32 %v283, %v284
        %v286 = vrot.slane %v285, 2
        %v287 = vadd.f32 %v285, %v286
        %v288 = vrot.slane %v287, 1
        %v289 = vadd.f32 %v287, %v288
        %v290 = vadd.f32 %v270, %v273
        %v291 = vadd.f32 %v290, %v276
        %v292 = vadd.f32 %v291, %v279
        %v293 = vrot.slane %v292, 4
        %v294 = vadd.f32 %v292, %v293
        %v295 = vrot.slane %v294, 2
        %v296 = vadd.f32 %v294, %v295
        %v297 = vrot.slane %v296, 1
        %v298 = vadd.f32 %v296, %v297
        %v299 = vsel %vm239, %v271, 0.0
        %v300 = vsel %vm239, %v274, 0.0
        %v301 = vadd.f32 %v299, %v300
        %v302 = vsel %vm239, %v277, 0.0
        %v303 = vadd.f32 %v301, %v302
        %v304 = vsel %vm239, %v280, 0.0
        %v305 = vadd.f32 %v303, %v304
        %v306 = vrot.slane %v305, 4
        %v307 = vadd.f32 %v305, %v306
        %v308 = vrot.slane %v307, 2
        %v309 = vadd.f32 %v307, %v308
        %v310 = vrot.slane %v309, 1
        %v311 = vadd.f32 %v309, %v310
        %v312 = vmul.f32 %v289, 0.032258064
        %v313 = vmul.f32 %v298, 0.032258064
        %v314 = vmul.f32 %v311, 0.032258064
        %v315 = vadd.f32 %v312, 1e-05
        %v316 = vadd.f32 %v313, 1e-05
        %v317 = vadd.f32 %v314, 1e-05
        %v318 = vrsqrt.pop %v315
        %v319 = vrsqrt.pop %v316
        %v320 = vrsqrt.pop %v317
        %v321 = vmul.f32 %v257, %v318
        %v322 = vmul.f32 %v258, %v319
        %v323 = vmul.f32 %v259, %v320
        %v324 = vmul.f32 %v260, %v318
        %v325 = vmul.f32 %v261, %v319
        %v326 = vmul.f32 %v262, %v320
        %v327 = vmul.f32 %v263, %v318
        %v328 = vmul.f32 %v264, %v319
        %v329 = vmul.f32 %v265, %v320
        %v330 = vmul.f32 %v266, %v318
        %v331 = vmul.f32 %v267, %v319
        %v332 = vmul.f32 %v268, %v320
        %v333 = vld [vmem:[%s1] sm:$0xff]
        %v334 = vld [vmem:[%s1 + $0x8] sm:$0xff]
        %v335 = vld [vmem:[%s1 + $0x10] sm:$0xff]
        %v336 = vld [vmem:[%s1 + $0x18] sm:$0xff]
        %338 = vset.pattern.permute.xlu0 0
        %339 = vperm.xlu0 %338, %v333
        %v340 = vpop.permute.xlu0 %339
        %343 = vset.pattern.permute.xlu0 0
        %344 = vperm.xlu0 %343, %v334
        %v345 = vpop.permute.xlu0 %344
        %348 = vset.pattern.permute.xlu0 0
        %349 = vperm.xlu0 %348, %v335
        %v350 = vpop.permute.xlu0 %349
        %353 = vset.pattern.permute.xlu0 0
        %354 = vperm.xlu0 %353, %v336
        %v355 = vpop.permute.xlu0 %354
        %v357 = vmul.f32 %v321, %v340
        %v358 = vmul.f32 %v322, %v340
        %v359 = vmul.f32 %v323, %v340
        %v360 = vmul.f32 %v324, %v345
        %v361 = vmul.f32 %v325, %v345
        %v362 = vmul.f32 %v326, %v345
        %v363 = vmul.f32 %v327, %v350
        %v364 = vmul.f32 %v328, %v350
        %v365 = vmul.f32 %v329, %v350
        %v366 = vmul.f32 %v330, %v355
        %v367 = vmul.f32 %v331, %v355
        %v368 = vmul.f32 %v332, %v355
        %v369 = vld [vmem:[%s2] sm:$0xff]
        %v370 = vld [vmem:[%s2 + $0x8] sm:$0xff]
        %v371 = vld [vmem:[%s2 + $0x10] sm:$0xff]
        %v372 = vld [vmem:[%s2 + $0x18] sm:$0xff]
        %374 = vset.pattern.permute.xlu0 0
        %375 = vperm.xlu0 %374, %v369
        %v376 = vpop.permute.xlu0 %375
        %379 = vset.pattern.permute.xlu0 0
        %380 = vperm.xlu0 %379, %v370
        %v381 = vpop.permute.xlu0 %380
        %384 = vset.pattern.permute.xlu0 0
        %385 = vperm.xlu0 %384, %v371
        %v386 = vpop.permute.xlu0 %385
        %389 = vset.pattern.permute.xlu0 0
        %390 = vperm.xlu0 %389, %v372
        %v391 = vpop.permute.xlu0 %390
        %v393 = vadd.f32 %v357, %v376
        %v394 = vadd.f32 %v358, %v376
        %v395 = vadd.f32 %v359, %v376
        %v396 = vadd.f32 %v360, %v381
        %v397 = vadd.f32 %v361, %v381
        %v398 = vadd.f32 %v362, %v381
        %v399 = vadd.f32 %v363, %v386
        %v400 = vadd.f32 %v364, %v386
        %v401 = vadd.f32 %v365, %v386
        %v402 = vadd.f32 %v366, %v391
        %v403 = vadd.f32 %v367, %v391
        %v404 = vadd.f32 %v368, %v391
        %405 = vst [vmem:[%s206] sm:$0xff] %v393
        %406 = vst [vmem:[%s206 + $0x8] sm:$0xff] %v394
        %407 = vst.msk [vmem:[%s206 + $0x10] sm:$0xff] %vm239, %v395
        %408 = vst [vmem:[%s206 + $0x18] sm:$0xff] %v396
        %409 = vst [vmem:[%s206 + $0x20] sm:$0xff] %v397
        %410 = vst.msk [vmem:[%s206 + $0x28] sm:$0xff] %vm239, %v398
        %411 = vst [vmem:[%s206 + $0x30] sm:$0xff] %v399
        %412 = vst [vmem:[%s206 + $0x38] sm:$0xff] %v400
        %413 = vst.msk [vmem:[%s206 + $0x40] sm:$0xff] %vm239, %v401
        %414 = vst [vmem:[%s206 + $0x48] sm:$0xff] %v402
        %415 = vst [vmem:[%s206 + $0x50] sm:$0xff] %v403
        %416 = vst.msk [vmem:[%s206 + $0x58] sm:$0xff] %vm239, %v404
        %s417 = sand.u32 %s112, 1
        %s418 = scalar_lea.sflag [#allocation4], %s417
        %s419 = sand.u32 %s112, 1
        %s420 = smul.addr %s419, 96
        %s421 = scalar_lea.vmem [#allocation5], %s420
        // Predicated region
        $region37: #{channel_norm_forward.1} parent=31 // pred_check
          %p422 = pneg %p122
        $region38: #{channel_norm_forward.1} parent=31 // pred_check_branch
          %424 = sbr.rel (%p422) target = $region40
        $region39: #{channel_norm_forward.1} parent=31 // pred_region
          %s425 = smul.u32 3, %s25
          %s427 = ssub.s32 1536, 1536
          %428 = vsyncadd %s418, %s427
          %s429 = smul.addr %s24, 12
          %s430 = sadd.s32 %s425, %s429
          %s431 = smul.addr %s430, 128
          %s432 = scalar_lea.hbm %s3, %s431
          %s433 = sshll.u32 %s421, 4
          %s434 = int_to_ptr.vmem [resolvable:$true] %s433
          %439 = dma.vmem_to_hbm [thread:$0]  %s434, 1536, %s432, %s418, 384, 384, 24
        $region40: #{channel_norm_forward.1} parent=31 // pred_fallthru
          _
      $region32: #{channel_norm_forward.1} parent=5 // pred_fallthru
        _
      %p440 = scmp.le.s32.totalorder 2, %s15
      // Predicated region
      $region41: #{channel_norm_forward.1} parent=5 // pred_check
        %p441 = pneg %p440
      $region42: #{channel_norm_forward.1} parent=5 // pred_check_branch
        %443 = sbr.rel (%p441) target = $region44
      $region43: #{channel_norm_forward.1} parent=5 // pred_region
        %s444 = ssub.s32 %s15, 2
        // Predicated region
        $region45: #{channel_norm_forward.1} parent=43 // pred_check
          %p445 = pneg %p128
        $region46: #{channel_norm_forward.1} parent=43 // pred_check_branch
          %447 = sbr.rel (%p445) target = $region48
        $region47: #{channel_norm_forward.1} parent=43 // pred_region
          %s448 = sand.u32 %s113, 1
          %s449 = scalar_lea.sflag [#allocation4], %s448
          %s450 = sand.u32 %s113, 1
          %s451 = smul.addr %s450, 96
          %s452 = scalar_lea.vmem [#allocation5], %s451
          %453 = dma.done %s449, 1536
        $region48: #{channel_norm_forward.1} parent=43 // pred_fallthru
          _
      $region44: #{channel_norm_forward.1} parent=5 // pred_fallthru
        _
    $region6: #{channel_norm_forward.1} parent=1 // loop_footer
      %s19 = sadd.s32 1, %s15
    $region7: #{channel_norm_forward.1} parent=1 // loop_footer_branch
      %14 = sbr.rel target = $region3
    $region8: #{channel_norm_forward.1} parent=1 // loop_exit
      _
    %454 = vsyncpa [#allocation3], 1
    %s455 = scalar_lea.sflag [#allocation3], 1
    %456 = vsyncpa %s455, 1
    %457 = vsyncpa [#allocation4], 1
    %s458 = scalar_lea.sflag [#allocation4], 1
    %459 = vsyncpa %s458, 1

</llo_original>
